<compile_context>
chip_gen: v7x
topology: tpu7x:2x2x1
jax: 0.10.0
libtpu: 0.0.40
codegen_flags: <defaults>
</compile_context>

<pallas_src>
import jax
import jax.numpy as jnp
from jax.experimental import pallas as pl
from jax.experimental.pallas import tpu as pltpu


def _log_softmax_kernel(x_ref, o_ref):
    # x_ref block: (Nb, C, tHW) -- reduce over the channel axis (axis 1).
    x = x_ref[...].astype(jnp.float32)
    m = jnp.max(x, axis=1, keepdims=True)
    s = x - m
    lse = jnp.log(jnp.sum(jnp.exp(s), axis=1, keepdims=True))
    o_ref[...] = (s - lse).astype(o_ref.dtype)


_TARGET_BLOCK_BYTES = 1 << 20    # ~1 MiB per block; 4x (double-buffered in+out)
                                 # = ~4 MiB pipelined VMEM on every chip gen.
_PALLAS_MIN_BYTES = 256 << 10    # below this, XLA's fused log_softmax already
                                 # hits roofline; skip the pallas_call.


def _choose_tiles(N, C, HW, itemsize):
    """Pick (n_block, hw_tile, hw_padded, n_padded) for the (N, C, HW) layout."""
    # ---- lane (H*W) tile: multiple of 128 (or full dim) => unmasked stores ----
    if HW <= 128:
        t_hw = HW                                   # full dim: (8,128) rule OK
    else:
        hw128 = pl.cdiv(HW, 128) * 128
        if C * hw128 * itemsize <= _TARGET_BLOCK_BYTES:
            t_hw = hw128                            # whole (padded) spatial extent
        else:
            t_hw = max(128, (_TARGET_BLOCK_BYTES // (C * itemsize)) // 128 * 128)
    hw_pad = pl.cdiv(HW, t_hw) * t_hw

    # ---- batch (N) tile: fill the block up to the byte target ----
    block_row_bytes = C * t_hw * itemsize
    n_b = max(1, min(N, _TARGET_BLOCK_BYTES // block_row_bytes))
    # Keep >= 2 grid steps when N allows it (megacore sharding / pipelining).
    if N >= 2 and pl.cdiv(N, n_b) < 2:
        n_b = pl.cdiv(N, 2)
    n_pad = pl.cdiv(N, n_b) * n_b
    return n_b, t_hw, hw_pad, n_pad


def _log_softmax_nchw_pallas(x2):
    """log_softmax over axis 1 of an (N, C, HW) array via a tiled Pallas kernel."""
    N, C, HW = x2.shape
    itemsize = jnp.dtype(x2.dtype).itemsize
    n_b, t_hw, hw_pad, n_pad = _choose_tiles(N, C, HW, itemsize)

    if hw_pad != HW or n_pad != N:
        # Zero padding is benign: the C-axis reduction of padded lanes/rows
        # produces finite garbage that is sliced off below.
        x2 = jnp.pad(x2, ((0, n_pad - N), (0, 0), (0, hw_pad - HW)))

    grid = (n_pad // n_b, hw_pad // t_hw)
    out = pl.pallas_call(
        _log_softmax_kernel,
        out_shape=jax.ShapeDtypeStruct((n_pad, C, hw_pad), x2.dtype),
        grid_spec=pltpu.PrefetchScalarGridSpec(
            num_scalar_prefetch=0,
            grid=grid,
            in_specs=[pl.BlockSpec((n_b, C, t_hw), lambda n, h: (n, 0, h))],
            out_specs=pl.BlockSpec((n_b, C, t_hw), lambda n, h: (n, 0, h)),
        ),
        compiler_params=pltpu.CompilerParams(
            dimension_semantics=("parallel", "parallel")),
    )(x2)
    return out[:N, :, :HW]


def cnn2_forward(params, x, *, force_pallas=False):
    """Forward pass of CNN2: log_softmax(x, dim=1).

    TODO(synk): `x.view()` in the reference has its return value discarded
    (no-op); conv/convDrop/fcl params are unused in forward, so only the
    log_softmax hot path is implemented in the kernel.
    """
    del params  # unused in the reference forward
    N, C, H, W = x.shape
    total_bytes = x.size * jnp.dtype(x.dtype).itemsize
    if not force_pallas and total_bytes < _PALLAS_MIN_BYTES:
        # Tiny inputs: pallas_call launch/pipeline overhead exceeds the entire
        # data movement; XLA's fused elementwise path already hits roofline.
        return jax.nn.log_softmax(x, axis=1)
    x2 = x.reshape(N, C, H * W)          # lane-dense trailing axis
    out = _log_softmax_nchw_pallas(x2)
    return out.reshape(N, C, H, W)


def init_params(key):
    """Deterministic parameter init mirroring CNN2.__init__ shapes."""
    k1, k2 = jax.random.split(key, 2)
    return {
        # nn.Conv2d(1, 10, kernel_size=5, stride=1)
        "conv_w": jax.random.normal(k1, (10, 1, 5, 5), jnp.float32) * 0.1,
        "conv_b": jnp.zeros((10,), jnp.float32),
        # nn.Linear(320, 50)
        "fc_w": jax.random.normal(k2, (50, 320), jnp.float32) * 0.05,
        "fc_b": jnp.zeros((50,), jnp.float32),
    }


if __name__ == "__main__":
    key = jax.random.PRNGKey(0)
    pkey, xkey1, xkey2 = jax.random.split(key, 3)
    params = init_params(pkey)

    # Test 1: toy NCHW shape (batch=2, channels=4, spatial=16x16).
    # Force the Pallas path so the kernel itself is exercised.
    x1 = jax.random.normal(xkey1, (2, 4, 16, 16), jnp.float32)
    y1 = jax.block_until_ready(cnn2_forward(params, x1, force_pallas=True))
    ref1 = jax.nn.log_softmax(x1, axis=1)
    assert y1.shape == x1.shape and y1.dtype == x1.dtype
    assert jnp.allclose(y1, ref1, atol=1e-5), float(jnp.max(jnp.abs(y1 - ref1)))

    # Test 2: MNIST-like 28x28 spatial (H*W=784, not a 128-multiple) with a
    # larger batch, exercising the lane-padding + N-batching tiling path.
    x2 = jax.random.normal(xkey2, (16, 4, 28, 28), jnp.float32)
    y2 = jax.block_until_ready(cnn2_forward(params, x2, force_pallas=True))
    ref2 = jax.nn.log_softmax(x2, axis=1)
    assert y2.shape == x2.shape and y2.dtype == x2.dtype
    assert jnp.allclose(y2, ref2, atol=1e-5), float(jnp.max(jnp.abs(y2 - ref2)))

    # Default dispatch path for tiny inputs (pure-JAX fallback) stays correct.
    y3 = jax.block_until_ready(cnn2_forward(params, x1))
    assert jnp.allclose(y3, ref1, atol=1e-5)

    print("KERNEL_OK")
</pallas_src>

<mosaic_0001>
module attributes {stable_mosaic.version = 11 : i64} {
  func.func @_log_softmax_kernel(%arg0: i32, %arg1: i32, %arg2: memref<1x4x256xf32, #tpu.memory_space<vmem>>, %arg3: memref<1x4x256xf32, #tpu.memory_space<vmem>>) attributes {dimension_semantics = [#tpu.dimension_semantics<parallel>, #tpu.dimension_semantics<parallel>], iteration_bounds = array<i64: 2, 1>, scalar_prefetch = 0 : i64, scratch_operands = 0 : i64, tpu.core_type = #tpu.core_type<tc>, window_params = [{transform_indices = @transform_0, window_bounds = array<i64: 1, 4, 256>}, {transform_indices = @transform_1, window_bounds = array<i64: 1, 4, 256>}]} {
    %c0 = arith.constant 0 : index
    %c0_0 = arith.constant 0 : index
    %c0_1 = arith.constant 0 : index
    %0 = vector.load %arg2[%c0, %c0_0, %c0_1] : memref<1x4x256xf32, #tpu.memory_space<vmem>>, vector<1x4x256xf32>
    %cst = arith.constant dense<0xFF800000> : vector<1x256xf32>
    %1 = vector.multi_reduction <maximumf>, %0, %cst [1] : vector<1x4x256xf32> to vector<1x256xf32>
    %2 = vector.shape_cast %1 : vector<1x256xf32> to vector<1x1x256xf32>
    %3 = vector.broadcast %2 : vector<1x1x256xf32> to vector<1x4x256xf32>
    %4 = arith.subf %0, %3 : vector<1x4x256xf32>
    %5 = math.exp %4 : vector<1x4x256xf32>
    %cst_2 = arith.constant dense<0.000000e+00> : vector<1x256xf32>
    %6 = vector.multi_reduction <add>, %5, %cst_2 [1] : vector<1x4x256xf32> to vector<1x256xf32>
    %7 = vector.shape_cast %6 : vector<1x256xf32> to vector<1x1x256xf32>
    %8 = math.log %7 : vector<1x1x256xf32>
    %9 = vector.broadcast %8 : vector<1x1x256xf32> to vector<1x4x256xf32>
    %10 = arith.subf %4, %9 : vector<1x4x256xf32>
    %c0_3 = arith.constant 0 : index
    %c0_4 = arith.constant 0 : index
    %c0_5 = arith.constant 0 : index
    %11 = vector.load %arg3[%c0_3, %c0_4, %c0_5] : memref<1x4x256xf32, #tpu.memory_space<vmem>>, vector<1x4x256xf32>
    tpu.vector_store %arg3[%c0_3, %c0_4, %c0_5], %10 {strides = array<i32>} : memref<1x4x256xf32, #tpu.memory_space<vmem>>, vector<1x4x256xf32>,
    return
  }
  func.func @transform_0(%arg0: i32, %arg1: i32) -> (i32, i32, i32) {
    %c0_i32 = arith.constant 0 : i32
    %c0_i32_0 = arith.constant 0 : i32
    return %arg0, %c0_i32, %arg1 : i32, i32, i32
  }
  func.func @transform_1(%arg0: i32, %arg1: i32) -> (i32, i32, i32) {
    %c0_i32 = arith.constant 0 : i32
    %c0_i32_0 = arith.constant 0 : i32
    return %arg0, %c0_i32, %arg1 : i32, i32, i32
  }
}

</mosaic_0001>

<llo_original>
// kernel: tpu_custom_call.1
$region0: #{tpu_custom_call.1}
  #allocation0 [shape = 'u32[]', space=smem, size = 0x4, offset = 0x4, fixed_abs, tag = 'smem constant byte address 0x4 - core index']
  #allocation1 [shape = 'u32[144,128]{1,0:T(1,128)}', space=vmem, size = 0x12000, scoped, tag = 'internal scratch']
  %s0 = inlined_call_operand.hbm [shape: f32[2,4,256], index: 0, kind: input, shape index: {}]
  %s1 = inlined_call_operand.hbm [shape: f32[2,4,256], index: 1, kind: output, shape index: {}]
  %s2 = sld [smem:[#allocation0]]
  $region41: #{tpu_custom_call.1} parent=0
    _
  %s4 = ssub.s32 1, %s2
  %s5 = scalar_select 0, %s4, %s2
  $region1: #{tpu_custom_call.1} parent=0
    #allocation2 [shape = 'u8[8192]{0}', space=vmem, size = 0x2000, scoped, tag = 'input window, operand 0']
    #allocation3 [shape = 's32[2]{0}', space=sflag, size = 0x8, scoped, tag = 'scoped memory for tpu_custom_call.1']
    #allocation4 [shape = 's32[2]{0}', space=sflag, size = 0x8, scoped, tag = 'scoped memory for tpu_custom_call.1']
    #allocation5 [shape = 'u8[8192]{0}', space=vmem, size = 0x2000, scoped, tag = 'output window, operand 0']
    %6 = vsyncpa [#allocation3], 0
    %s7 = scalar_lea.sflag [#allocation3], 1
    %8 = vsyncpa %s7, 0
    %9 = vsyncpa [#allocation4], 0
    %s10 = scalar_lea.sflag [#allocation4], 1
    %11 = vsyncpa %s10, 0
    loop: start=0, step=1, limit=4
    $region2: #{tpu_custom_call.1} parent=1 // loop_pre_header
      _
    $region3: #{tpu_custom_call.1} parent=1 // loop_header
      %s13 = sphi 0, %s17
      %p14 = scmp.ge.s32.totalorder %s13, 4
      %s20 = sphi 0, %s32
      %s21 = sphi 0, %s28
      %s22 = sphi 0, %s20
      %s23 = sphi 0, %s21
      %s24 = sphi 0, %s22
      %s25 = sphi 0, %s23
      %s37 = sphi 0, %s39
      %s40 = sphi 0, %s37
      %s41 = sphi 0, %s40
      %s57 = sphi 0, %s41
      %s65 = sphi 0, %s67
      %s68 = sphi 0, %s65
      %s69 = sphi 0, %s68
      %s85 = sphi 0, %s69
    $region4: #{tpu_custom_call.1} parent=1 // loop_header_branch
      %16 = sbr.rel (%p14) target = $region8
    $region5: #{tpu_custom_call.1} parent=1 // loop_body
      %s18 = ssub.s32 %s13, 1
      %s19 = ssub.s32 %s13, 2
      %s26 = sadd.s32 1, %s21
      %p27 = scmp.ge.s32.totalorder %s26, 1
      %s28 = scalar_select %p27, 0, %s26
      %s29 = sadd.s32 1, %s20
      %s30 = scalar_select %p27, %s29, %s20
      %p31 = scmp.ge.s32.totalorder %s30, 2
      %s32 = scalar_select %p31, 0, %s30
      %s33 = ssub.s32 %s20, %s32
      %s34 = ssub.s32 %s21, %s28
      %s35 = sor.u32 %s33, %s34
      %p36 = scmp.eq.s32.totalorder %s35, 0
      %s38 = sadd.s32 %s37, 1
      %s39 = scalar_select %p36, %s37, %s38
      %p42 = pneg %p36
      %p43 = scmp.eq.s32.totalorder %s13, 1
      %p44 = por %p42, %p43
      %p45 = scmp.ne.s32.totalorder %s37, %s40
      %p46 = scmp.eq.s32.totalorder %s13, 0
      %p47 = por %p45, %p46
      %p48 = scmp.ne.s32.totalorder %s37, %s40
      %p49 = scmp.eq.s32.totalorder %s18, 1
      %p50 = por %p48, %p49
      %p51 = scmp.ne.s32.totalorder %s40, %s41
      %p52 = scmp.eq.s32.totalorder %s18, 0
      %p53 = por %p51, %p52
      %p54 = scmp.ne.s32.totalorder %s40, %s41
      %p55 = scmp.eq.s32.totalorder %s19, 1
      %p56 = por %p54, %p55
      %p58 = scmp.ne.s32.totalorder %s41, %s57
      %p59 = scmp.eq.s32.totalorder %s19, 0
      %p60 = por %p58, %p59
      %s61 = ssub.s32 %s20, %s32
      %s62 = ssub.s32 %s21, %s28
      %s63 = sor.u32 %s61, %s62
      %p64 = scmp.eq.s32.totalorder %s63, 0
      %s66 = sadd.s32 %s65, 1
      %s67 = scalar_select %p64, %s65, %s66
      %p70 = pneg %p64
      %p71 = scmp.eq.s32.totalorder %s13, 1
      %p72 = por %p70, %p71
      %p73 = scmp.ne.s32.totalorder %s65, %s68
      %p74 = scmp.eq.s32.totalorder %s13, 0
      %p75 = por %p73, %p74
      %p76 = scmp.ne.s32.totalorder %s65, %s68
      %p77 = scmp.eq.s32.totalorder %s18, 1
      %p78 = por %p76, %p77
      %p79 = scmp.ne.s32.totalorder %s68, %s69
      %p80 = scmp.eq.s32.totalorder %s18, 0
      %p81 = por %p79, %p80
      %p82 = scmp.ne.s32.totalorder %s68, %s69
      %p83 = scmp.eq.s32.totalorder %s19, 1
      %p84 = por %p82, %p83
      %p86 = scmp.ne.s32.totalorder %s69, %s85
      %p87 = scmp.eq.s32.totalorder %s19, 0
      %p88 = por %p86, %p87
      %p89 = scmp.le.s32.totalorder 1, %s13
      %p90 = scmp.lt.s32.totalorder %s13, 3
      %p91 = pnand %p89, %p90
      %p92 = pneg %p91
      // Predicated region
      $region9: #{tpu_custom_call.1} parent=5 // pred_check
        _
      $region10: #{tpu_custom_call.1} parent=5 // pred_check_branch
        %94 = sbr.rel (%p91) target = $region12
      $region11: #{tpu_custom_call.1} parent=5 // pred_region
        %s95 = ssub.s32 %s13, 1
      $region12: #{tpu_custom_call.1} parent=5 // pred_fallthru
        _
      %p96 = scmp.lt.s32.totalorder %s13, 2
      // Predicated region
      $region13: #{tpu_custom_call.1} parent=5 // pred_check
        %p97 = pneg %p96
      $region14: #{tpu_custom_call.1} parent=5 // pred_check_branch
        %99 = sbr.rel (%p97) target = $region16
      $region15: #{tpu_custom_call.1} parent=5 // pred_region
        // Predicated region
        $region17: #{tpu_custom_call.1} parent=15 // pred_check
          %p100 = pneg %p47
        $region18: #{tpu_custom_call.1} parent=15 // pred_check_branch
          %102 = sbr.rel (%p100) target = $region20
        $region19: #{tpu_custom_call.1} parent=15 // pred_region
          %s103 = sand.u32 %s37, 1
          %s104 = scalar_lea.sflag [#allocation3], %s103
          %s105 = sand.u32 %s37, 1
          %s106 = smul.addr %s105, 8
          %s107 = scalar_lea.vmem [#allocation2], %s106
          %s108 = smul.u32 2, %s21
          %s110 = ssub.s32 128, 128
          %111 = vsyncadd %s104, %s110
          %s112 = smul.addr %s20, 2
          %s113 = sadd.s32 %s108, %s112
          %s114 = smul.addr %s113, 64
          %s115 = scalar_lea.hbm %s0, %s114
          %s117 = sshll.u32 %s107, 4
          %s118 = int_to_ptr.vmem [resolvable:$true] %s117
          %120 = dma.hbm_to_vmem [thread:$0]  %s115, 128, %s118, %s104
        $region20: #{tpu_custom_call.1} parent=15 // pred_fallthru
          _
      $region16: #{tpu_custom_call.1} parent=5 // pred_fallthru
        _
      %p121 = scmp.le.s32.totalorder 1, %s13
      %p122 = scmp.lt.s32.totalorder %s13, 3
      %p123 = pnand %p121, %p122
      %p124 = pneg %p123
      // Predicated region
      $region21: #{tpu_custom_call.1} parent=5 // pred_check
        _
      $region22: #{tpu_custom_call.1} parent=5 // pred_check_branch
        %126 = sbr.rel (%p123) target = $region24
      $region23: #{tpu_custom_call.1} parent=5 // pred_region
        %s127 = ssub.s32 %s13, 1
        %s128 = sand.u32 %s40, 1
        %s129 = scalar_lea.sflag [#allocation3], %s128
        %s130 = sand.u32 %s40, 1
        %s131 = smul.addr %s130, 8
        %s132 = scalar_lea.vmem [#allocation2], %s131
        // Predicated region
        $region25: #{tpu_custom_call.1} parent=23 // pred_check
          %p133 = pneg %p53
        $region26: #{tpu_custom_call.1} parent=23 // pred_check_branch
          %135 = sbr.rel (%p133) target = $region28
        $region27: #{tpu_custom_call.1} parent=23 // pred_region
          %136 = dma.done %s129, 128
        $region28: #{tpu_custom_call.1} parent=23 // pred_fallthru
          _
        %s137 = sand.u32 %s40, 1
        %s138 = scalar_lea.sflag [#allocation3], %s137
        %s139 = sand.u32 %s40, 1
        %s140 = smul.addr %s139, 8
        %s141 = scalar_lea.vmem [#allocation2], %s140
        %p142 = pneg %p53
        %p143 = pneg %p50
        %p144 = pneg %p81
        %p145 = pneg %p78
        %s146 = sand.u32 %s68, 1
        %s147 = scalar_lea.sflag [#allocation4], %s146
        %s148 = sand.u32 %s68, 1
        %s149 = smul.addr %s148, 8
        %s150 = scalar_lea.vmem [#allocation5], %s149
        %s151 = smul.u32 2, %s23
        %s152 = smul.u32 2, %s23
        %v153 = vld [vmem:[%s132] sm:$0xff]
        %v155 = vcombine.high %v153, %v153
        %vm157 = vcmask 1043456
        %v158 = vsel %vm157, %v153, -inf
        %v159 = vrot.slane %v158, 4
        %v160 = vmax.f32 %v158, %v159
        %v161 = vrot.slane %v160, 2
        %v162 = vmax.f32 %v160, %v161
        %v163 = vrot.slane %v162, 1
        %v164 = vmax.f32 %v162, %v163
        %v165 = vsel %vm157, %v155, -inf
        %v166 = vrot.slane %v165, 4
        %v167 = vmax.f32 %v165, %v166
        %v168 = vrot.slane %v167, 2
        %v169 = vmax.f32 %v167, %v168
        %v170 = vrot.slane %v169, 1
        %v171 = vmax.f32 %v169, %v170
        %v174 = vcombine.low %v164, %v171
        %v176 = vsub.f32 %v153, %v174
        %v177 = vmul.f32 %v176, 1.442695
        %v178 = vpow.pop %v177
        %v180 = vcombine.high %v178, %v178
        %v182 = vsel %vm157, %v178, 0.0
        %v183 = vrot.slane %v182, 4
        %v184 = vadd.f32 %v182, %v183
        %v185 = vrot.slane %v184, 2
        %v186 = vadd.f32 %v184, %v185
        %v187 = vrot.slane %v186, 1
        %v188 = vadd.f32 %v186, %v187
        %v189 = vsel %vm157, %v180, 0.0
        %v190 = vrot.slane %v189, 4
        %v191 = vadd.f32 %v189, %v190
        %v192 = vrot.slane %v191, 2
        %v193 = vadd.f32 %v191, %v192
        %v194 = vrot.slane %v193, 1
        %v195 = vadd.f32 %v193, %v194
        %v196 = vlog2.pop %v188
        %v197 = vmul.f32 %v196, 0.6931472
        %v198 = vlog2.pop %v195
        %v199 = vmul.f32 %v198, 0.6931472
        %v202 = vcombine.low %v197, %v199
        %v204 = vsub.f32 %v176, %v202
        %205 = vst [vmem:[%s150] sm:$0xff] %v204
        %s206 = sand.u32 %s68, 1
        %s207 = scalar_lea.sflag [#allocation4], %s206
        %s208 = sand.u32 %s68, 1
        %s209 = smul.addr %s208, 8
        %s210 = scalar_lea.vmem [#allocation5], %s209
        // Predicated region
        $region29: #{tpu_custom_call.1} parent=23 // pred_check
          %p211 = pneg %p78
        $region30: #{tpu_custom_call.1} parent=23 // pred_check_branch
          %213 = sbr.rel (%p211) target = $region32
        $region31: #{tpu_custom_call.1} parent=23 // pred_region
          %s214 = smul.u32 2, %s23
          %s216 = ssub.s32 128, 128
          %217 = vsyncadd %s207, %s216
          %s218 = smul.addr %s22, 2
          %s219 = sadd.s32 %s214, %s218
          %s220 = smul.addr %s219, 64
          %s221 = scalar_lea.hbm %s1, %s220
          %s223 = sshll.u32 %s210, 4
          %s224 = int_to_ptr.vmem [resolvable:$true] %s223
          %226 = dma.vmem_to_hbm [thread:$0]  %s224, 128, %s221, %s207
        $region32: #{tpu_custom_call.1} parent=23 // pred_fallthru
          _
      $region24: #{tpu_custom_call.1} parent=5 // pred_fallthru
        _
      %p227 = scmp.le.s32.totalorder 2, %s13
      // Predicated region
      $region33: #{tpu_custom_call.1} parent=5 // pred_check
        %p228 = pneg %p227
      $region34: #{tpu_custom_call.1} parent=5 // pred_check_branch
        %230 = sbr.rel (%p228) target = $region36
      $region35: #{tpu_custom_call.1} parent=5 // pred_region
        %s231 = ssub.s32 %s13, 2
        // Predicated region
        $region37: #{tpu_custom_call.1} parent=35 // pred_check
          %p232 = pneg %p84
        $region38: #{tpu_custom_call.1} parent=35 // pred_check_branch
          %234 = sbr.rel (%p232) target = $region40
        $region39: #{tpu_custom_call.1} parent=35 // pred_region
          %s235 = sand.u32 %s69, 1
          %s236 = scalar_lea.sflag [#allocation4], %s235
          %s237 = sand.u32 %s69, 1
          %s238 = smul.addr %s237, 8
          %s239 = scalar_lea.vmem [#allocation5], %s238
          %240 = dma.done %s236, 128
        $region40: #{tpu_custom_call.1} parent=35 // pred_fallthru
          _
      $region36: #{tpu_custom_call.1} parent=5 // pred_fallthru
        _
    $region6: #{tpu_custom_call.1} parent=1 // loop_footer
      %s17 = sadd.s32 1, %s13
    $region7: #{tpu_custom_call.1} parent=1 // loop_footer_branch
      %12 = sbr.rel target = $region3
    $region8: #{tpu_custom_call.1} parent=1 // loop_exit
      _
    %241 = vsyncpa [#allocation3], 1
    %s242 = scalar_lea.sflag [#allocation3], 1
    %243 = vsyncpa %s242, 1
    %244 = vsyncpa [#allocation4], 1
    %s245 = scalar_lea.sflag [#allocation4], 1
    %246 = vsyncpa %s245, 1

</llo_original>
